<compile_context>
chip_gen: v7x
topology: tpu7x:2x2x1
jax: 0.10.0
libtpu: 0.0.40
codegen_flags: <defaults>
</compile_context>

<pallas_src>
import functools

import jax
import jax.numpy as jnp
from jax.experimental import pallas as pl
from jax.experimental.pallas import tpu as pltpu

LN_EPS = 1e-5

# Rows of the packed (16, D) f32 vector slab.
_ROW_B1, _ROW_G1, _ROW_BE1 = 0, 1, 2
_ROW_B2, _ROW_G2, _ROW_BE2 = 3, 4, 5
_ROW_B3, _ROW_G3, _ROW_BE3 = 6, 7, 8
_ROW_B4, _ROW_G4, _ROW_BE4 = 9, 10, 11
_ROW_BA, _ROW_WQ, _ROW_BQ = 12, 13, 14
_NUM_VEC_ROWS = 16                          # padded to a multiple of 8 sublanes


def _round_up(x, m):
    return ((x + m - 1) // m) * m


def critic_kernel(x_ref, win_ref, w_ref, vec_ref, out_ref, *, fc_dims):
    """One batch tile of the critic forward pass.

    x_ref   : (TB, F_pad)   f32   [state | action] rows (zero-padded cols/rows)
    win_ref : (F_pad, 2*D)  bf16  block-diagonal [[w1, 0], [0, wa]]
    w_ref   : (3, Kmax, D)  bf16  w2 / w3 / w4, zero-padded
    vec_ref : (16, D)       f32   biases / LN gamma,beta / ba / wq / bq rows
    out_ref : (TB, 1)       f32   q values
    """
    fc1, fc2, fc3, fc4 = fc_dims
    D = vec_ref.shape[1]
    kmax = w_ref.shape[1]

    def row(r):
        return vec_ref[r:r + 1, :]                        # (1, D) parameter row

    def ln_relu(h, g, be, f):
        # Fused LayerNorm (stats in f32).  Padded lanes of h are exactly zero,
        # so summing all D lanes and dividing by the real feature count f
        # matches nn.LayerNorm; gamma/beta are zero in padded lanes, so those
        # lanes stay exactly zero through the whole network.
        inv_f = 1.0 / float(f)
        s1 = jnp.sum(h, axis=-1, keepdims=True)
        s2 = jnp.sum(h * h, axis=-1, keepdims=True)
        mean = s1 * inv_f
        var = s2 * inv_f - mean * mean
        y = (h - mean) * jax.lax.rsqrt(var + LN_EPS) * g + be
        return jnp.maximum(y, 0.0)

    def mm(x, w):                                         # bf16 MXU, f32 accum
        return jnp.dot(x.astype(jnp.bfloat16), w,
                       preferred_element_type=jnp.float32)

    # Fused first layer: [state | action] @ [[w1, 0], [0, wa]] -> (TB, 2D).
    h_all = mm(x_ref[...], win_ref[...])
    av = jnp.maximum(h_all[:, D:] + row(_ROW_BA), 0.0)    # action branch (ReLU)
    x = ln_relu(h_all[:, :D] + row(_ROW_B1), row(_ROW_G1), row(_ROW_BE1), fc1)

    # fc2..fc4: contract only over the first Kmax lanes (the rest are zero).
    x = ln_relu(mm(x[:, :kmax], w_ref[0]) + row(_ROW_B2),
                row(_ROW_G2), row(_ROW_BE2), fc2)
    x = ln_relu(mm(x[:, :kmax], w_ref[1]) + row(_ROW_B3),
                row(_ROW_G3), row(_ROW_BE3), fc3)
    sv = ln_relu(mm(x[:, :kmax], w_ref[2]) + row(_ROW_B4),
                 row(_ROW_G4), row(_ROW_BE4), fc4)

    # combine, ReLU
    sa = jnp.maximum(sv + av, 0.0)

    # q head: a (TB, fc4) x (fc4, 1) matmul would waste a full MXU pass for one
    # output lane; do a VPU multiply + one XLU lane reduce instead (wq is zero
    # in padded lanes so summing all D lanes is exact).
    q = jnp.sum(sa * row(_ROW_WQ), axis=-1, keepdims=True)
    out_ref[...] = (q + row(_ROW_BQ)[:, :1]).astype(out_ref.dtype)


def pack_params(params, inp_dims, fc1, fc2, fc3, fc4, num_actions):
    """Pack the 20 raw parameters into 3 padded, DMA/MXU-friendly operands."""
    (w1, b1, g1, be1, w2, b2, g2, be2, w3, b3, g3, be3,
     w4, b4, g4, be4, wa, ba, wq, bq) = params
    D = _round_up(max(fc1, fc2, fc3, fc4, 128), 128)      # lane-dense hidden
    kmax = min(D, _round_up(max(fc1, fc2, fc3), 16))      # real contraction dim
    f_pad = max(16, _round_up(inp_dims + num_actions, 16))

    def pad_w(w, rows, cols):
        out = jnp.zeros((rows, cols), jnp.float32)
        return out.at[:w.shape[0], :w.shape[1]].set(w)

    def pad_row(v):
        out = jnp.zeros((1, D), jnp.float32)
        return out.at[:, :v.shape[1]].set(v)

    # Block-diagonal fused input weight: [[w1, 0], [0, wa]] -> (f_pad, 2D) bf16.
    win = jnp.zeros((f_pad, 2 * D), jnp.float32)
    win = win.at[:inp_dims, :fc1].set(w1)
    win = win.at[inp_dims:inp_dims + num_actions, D:D + fc4].set(wa)
    win = win.astype(jnp.bfloat16)

    w_slab = jnp.stack([pad_w(w2, kmax, D), pad_w(w3, kmax, D),
                        pad_w(w4, kmax, D)]).astype(jnp.bfloat16)  # (3,Kmax,D)

    rows = [b1, g1, be1, b2, g2, be2, b3, g3, be3, b4, g4, be4, ba,
            wq.reshape(1, -1)]
    vec = jnp.concatenate(
        [pad_row(r) for r in rows]
        + [jnp.broadcast_to(bq.astype(jnp.float32), (1, D)),
           jnp.zeros((_NUM_VEC_ROWS - len(rows) - 1, D), jnp.float32)],
        axis=0)                                           # (16, D) f32
    return win, w_slab, vec


def critic_forward(state, action, packed, *, fc_dims, tile_b=1024):
    win, w_slab, vec = packed
    B, sd = state.shape
    ad = action.shape[1]
    f_pad = win.shape[0]
    d2 = win.shape[1]
    kmax, D = w_slab.shape[1], w_slab.shape[2]

    # Batch tile: a multiple of 8, as large as requested, but capped so the
    # grid has >= 2 steps whenever B can be split (keeps both v7x TCs busy).
    tb = max(8, min(_round_up(tile_b, 8), _round_up((B + 1) // 2, 8)))
    grid_b = (B + tb - 1) // tb
    b_pad = grid_b * tb

    # One fused (state | action) operand, zero-padded rows/cols.  Padded rows
    # flow through LayerNorm harmlessly (constant row -> finite output) and
    # are sliced off below; padded cols hit zero weight rows.
    x_in = jnp.concatenate([state, action], axis=1).astype(jnp.float32)
    x_in = jnp.pad(x_in, ((0, b_pad - B), (0, f_pad - (sd + ad))))

    kernel = functools.partial(critic_kernel, fc_dims=fc_dims)
    out = pl.pallas_call(
        kernel,
        out_shape=jax.ShapeDtypeStruct((b_pad, 1), jnp.float32),
        grid_spec=pltpu.PrefetchScalarGridSpec(
            num_scalar_prefetch=0,
            grid=(grid_b,),
            in_specs=[
                pl.BlockSpec((tb, f_pad), lambda i: (i, 0)),        # input rows
                pl.BlockSpec((f_pad, d2), lambda i: (0, 0)),        # fused w1|wa
                pl.BlockSpec((3, kmax, D), lambda i: (0, 0, 0)),    # w2..w4 slab
                pl.BlockSpec((_NUM_VEC_ROWS, D), lambda i: (0, 0)), # vec slab
            ],
            out_specs=pl.BlockSpec((tb, 1), lambda i: (i, 0)),
        ),
        compiler_params=pltpu.CompilerParams(
            dimension_semantics=("parallel",),        # v7x: tiles across 2 TCs
        ),
    )(x_in, win, w_slab, vec)
    return out[:B]


def init_params(key, inp_dims, fc1, fc2, fc3, fc4, num_actions):
    """Deterministic init mirroring the PyTorch module's __init__ bounds."""
    ks = jax.random.split(key, 12)

    def uni(k, shape, bound):
        return jax.random.uniform(k, shape, jnp.float32, -bound, bound)

    # PyTorch code uses 1/sqrt(weight.size()[0]) == 1/sqrt(out_features).
    w1 = uni(ks[0], (inp_dims, fc1), 1.0 / jnp.sqrt(fc1))
    b1 = uni(ks[1], (1, fc1), 1.0 / jnp.sqrt(fc1))
    g1, be1 = jnp.ones((1, fc1), jnp.float32), jnp.zeros((1, fc1), jnp.float32)

    w2 = uni(ks[2], (fc1, fc2), 1.0 / jnp.sqrt(fc2))
    b2 = uni(ks[3], (1, fc2), 1.0 / jnp.sqrt(fc2))
    g2, be2 = jnp.ones((1, fc2), jnp.float32), jnp.zeros((1, fc2), jnp.float32)

    w3 = uni(ks[4], (fc2, fc3), 1.0 / jnp.sqrt(fc3))
    b3 = uni(ks[5], (1, fc3), 1.0 / jnp.sqrt(fc3))
    g3, be3 = jnp.ones((1, fc3), jnp.float32), jnp.zeros((1, fc3), jnp.float32)

    w4 = uni(ks[6], (fc3, fc4), 1.0 / jnp.sqrt(fc4))
    b4 = uni(ks[7], (1, fc4), 1.0 / jnp.sqrt(fc4))
    g4, be4 = jnp.ones((1, fc4), jnp.float32), jnp.zeros((1, fc4), jnp.float32)

    # action_value: PyTorch default Linear init -> bound 1/sqrt(in_features)
    wa = uni(ks[8], (num_actions, fc4), 1.0 / jnp.sqrt(num_actions))
    ba = uni(ks[9], (1, fc4), 1.0 / jnp.sqrt(num_actions))

    wq = uni(ks[10], (fc4, 1), 0.003)
    bq = uni(ks[11], (1, 1), 0.003)

    return (w1, b1, g1, be1, w2, b2, g2, be2, w3, b3, g3, be3,
            w4, b4, g4, be4, wa, ba, wq, bq)


def _layernorm(x, gamma, beta):
    mean = jnp.mean(x, axis=-1, keepdims=True)
    var = jnp.mean((x - mean) ** 2, axis=-1, keepdims=True)
    return (x - mean) * jax.lax.rsqrt(var + LN_EPS) * gamma + beta


def reference_forward(state, action, params):
    (w1, b1, g1, be1, w2, b2, g2, be2, w3, b3, g3, be3,
     w4, b4, g4, be4, wa, ba, wq, bq) = params
    x = jnp.maximum(_layernorm(state @ w1 + b1, g1, be1), 0.0)
    x = jnp.maximum(_layernorm(x @ w2 + b2, g2, be2), 0.0)
    x = jnp.maximum(_layernorm(x @ w3 + b3, g3, be3), 0.0)
    sv = jnp.maximum(_layernorm(x @ w4 + b4, g4, be4), 0.0)
    av = jnp.maximum(action @ wa + ba, 0.0)
    sa = jnp.maximum(sv + av, 0.0)
    return sa @ wq + bq


if __name__ == "__main__":
    # Small shapes consistent with the module (batch = module's default 64).
    B, inp_dims, fc1, fc2, fc3, fc4, num_actions = 64, 16, 64, 64, 32, 32, 4

    key = jax.random.PRNGKey(0)
    k_state, k_action, k_params = jax.random.split(key, 3)

    state = jax.random.normal(k_state, (B, inp_dims), jnp.float32)
    action = jax.random.uniform(k_action, (B, num_actions), jnp.float32, -1.0, 1.0)
    params = init_params(k_params, inp_dims, fc1, fc2, fc3, fc4, num_actions)
    packed = pack_params(params, inp_dims, fc1, fc2, fc3, fc4, num_actions)

    # Single jitted entry point; tb auto-caps at 32 here so the batch grid has
    # 2 steps (exercises the multi-tile / megacore path).
    fwd = jax.jit(functools.partial(critic_forward, fc_dims=(fc1, fc2, fc3, fc4)))
    out = jax.block_until_ready(fwd(state, action, packed))

    ref = reference_forward(state, action, params)
    assert out.shape == (B, 1), out.shape
    # bf16 MXU operands (f32 accumulate) relax bit-exact parity vs the f32 ref.
    assert jnp.allclose(out, ref, atol=1e-2, rtol=1e-2), (
        float(jnp.max(jnp.abs(out - ref))))

    # TODO(synk): optimizer (Adam) and checkpoint save/load from the PyTorch
    # module are training/IO utilities, not part of the forward pass.
    print("KERNEL_OK")
</pallas_src>

<mosaic_0001>
module attributes {stable_mosaic.version = 11 : i64} {
  func.func @critic_kernel(%arg0: i32, %arg1: memref<32x32xf32, #tpu.memory_space<vmem>>, %arg2: memref<32x256xbf16, #tpu.memory_space<vmem>>, %arg3: memref<3x64x128xbf16, #tpu.memory_space<vmem>>, %arg4: memref<16x128xf32, #tpu.memory_space<vmem>>, %arg5: memref<32x1xf32, #tpu.memory_space<vmem>>) attributes {dimension_semantics = [#tpu.dimension_semantics<parallel>], iteration_bounds = array<i64: 2>, scalar_prefetch = 0 : i64, scratch_operands = 0 : i64, tpu.core_type = #tpu.core_type<tc>, window_params = [{transform_indices = @transform_0, window_bounds = array<i64: 32, 32>}, {pipeline_mode = #tpu.pipeline_mode<synchronous>, transform_indices = @transform_1, window_bounds = array<i64: 32, 256>}, {pipeline_mode = #tpu.pipeline_mode<synchronous>, transform_indices = @transform_2, window_bounds = array<i64: 3, 64, 128>}, {pipeline_mode = #tpu.pipeline_mode<synchronous>, transform_indices = @transform_3, window_bounds = array<i64: 16, 128>}, {transform_indices = @transform_4, window_bounds = array<i64: 32, 1>}]} {
    %c0 = arith.constant 0 : index
    %c0_0 = arith.constant 0 : index
    %0 = vector.load %arg1[%c0, %c0_0] : memref<32x32xf32, #tpu.memory_space<vmem>>, vector<32x32xf32>
    %c0_1 = arith.constant 0 : index
    %c0_2 = arith.constant 0 : index
    %1 = vector.load %arg2[%c0_1, %c0_2] : memref<32x256xbf16, #tpu.memory_space<vmem>>, vector<32x256xbf16>
    %2 = arith.truncf %0 : vector<32x32xf32> to vector<32x32xbf16>
    %cst = arith.constant dense<0.000000e+00> : vector<32x256xf32>
    %3 = tpu.matmul %2, %1, %cst {dimension_numbers = #tpu.dot_dimension_numbers<[1], [0], [0], [1], [0, 0, 1, 1], [], []>} : vector<32x32xbf16>, vector<32x256xbf16>, vector<32x256xf32> -> vector<32x256xf32>
    %4 = vector.extract_strided_slice %3 {offsets = [0, 128], sizes = [32, 128], strides = [1, 1]} : vector<32x256xf32> to vector<32x128xf32>
    %c12 = arith.constant 12 : index
    %c0_3 = arith.constant 0 : index
    %5 = vector.load %arg4[%c12, %c0_3] : memref<16x128xf32, #tpu.memory_space<vmem>>, vector<1x128xf32>
    %6 = vector.broadcast %5 : vector<1x128xf32> to vector<32x128xf32>
    %7 = arith.addf %4, %6 : vector<32x128xf32>
    %cst_4 = arith.constant 0.000000e+00 : f32
    %8 = vector.broadcast %cst_4 : f32 to vector<32x128xf32>
    %9 = arith.maximumf %7, %8 : vector<32x128xf32>
    %10 = vector.extract_strided_slice %3 {offsets = [0, 0], sizes = [32, 128], strides = [1, 1]} : vector<32x256xf32> to vector<32x128xf32>
    %c0_5 = arith.constant 0 : index
    %c0_6 = arith.constant 0 : index
    %11 = vector.load %arg4[%c0_5, %c0_6] : memref<16x128xf32, #tpu.memory_space<vmem>>, vector<1x128xf32>
    %12 = vector.broadcast %11 : vector<1x128xf32> to vector<32x128xf32>
    %13 = arith.addf %10, %12 : vector<32x128xf32>
    %c1 = arith.constant 1 : index
    %c0_7 = arith.constant 0 : index
    %14 = vector.load %arg4[%c1, %c0_7] : memref<16x128xf32, #tpu.memory_space<vmem>>, vector<1x128xf32>
    %c2 = arith.constant 2 : index
    %c0_8 = arith.constant 0 : index
    %15 = vector.load %arg4[%c2, %c0_8] : memref<16x128xf32, #tpu.memory_space<vmem>>, vector<1x128xf32>
    %cst_9 = arith.constant dense<0.000000e+00> : vector<32xf32>
    %16 = vector.multi_reduction <add>, %13, %cst_9 [1] : vector<32x128xf32> to vector<32xf32>
    %17 = vector.shape_cast %16 : vector<32xf32> to vector<32x1xf32>
    %18 = arith.mulf %13, %13 : vector<32x128xf32>
    %cst_10 = arith.constant dense<0.000000e+00> : vector<32xf32>
    %19 = vector.multi_reduction <add>, %18, %cst_10 [1] : vector<32x128xf32> to vector<32xf32>
    %20 = vector.shape_cast %19 : vector<32xf32> to vector<32x1xf32>
    %cst_11 = arith.constant 1.562500e-02 : f32
    %21 = vector.broadcast %cst_11 : f32 to vector<32x1xf32>
    %22 = arith.mulf %17, %21 : vector<32x1xf32>
    %cst_12 = arith.constant 1.562500e-02 : f32
    %23 = vector.broadcast %cst_12 : f32 to vector<32x1xf32>
    %24 = arith.mulf %20, %23 : vector<32x1xf32>
    %25 = arith.mulf %22, %22 : vector<32x1xf32>
    %26 = arith.subf %24, %25 : vector<32x1xf32>
    %27 = vector.broadcast %22 : vector<32x1xf32> to vector<32x128xf32>
    %28 = arith.subf %13, %27 : vector<32x128xf32>
    %cst_13 = arith.constant 9.99999974E-6 : f32
    %29 = vector.broadcast %cst_13 : f32 to vector<32x1xf32>
    %30 = arith.addf %26, %29 : vector<32x1xf32>
    %31 = math.rsqrt %30 : vector<32x1xf32>
    %32 = vector.broadcast %31 : vector<32x1xf32> to vector<32x128xf32>
    %33 = arith.mulf %28, %32 : vector<32x128xf32>
    %34 = vector.broadcast %14 : vector<1x128xf32> to vector<32x128xf32>
    %35 = arith.mulf %33, %34 : vector<32x128xf32>
    %36 = vector.broadcast %15 : vector<1x128xf32> to vector<32x128xf32>
    %37 = arith.addf %35, %36 : vector<32x128xf32>
    %cst_14 = arith.constant 0.000000e+00 : f32
    %38 = vector.broadcast %cst_14 : f32 to vector<32x128xf32>
    %39 = arith.maximumf %37, %38 : vector<32x128xf32>
    %40 = vector.extract_strided_slice %39 {offsets = [0, 0], sizes = [32, 64], strides = [1, 1]} : vector<32x128xf32> to vector<32x64xf32>
    %c0_15 = arith.constant 0 : index
    %c0_16 = arith.constant 0 : index
    %c0_17 = arith.constant 0 : index
    %41 = vector.load %arg3[%c0_15, %c0_16, %c0_17] : memref<3x64x128xbf16, #tpu.memory_space<vmem>>, vector<1x64x128xbf16>
    %42 = vector.shape_cast %41 : vector<1x64x128xbf16> to vector<64x128xbf16>
    %43 = arith.truncf %40 : vector<32x64xf32> to vector<32x64xbf16>
    %cst_18 = arith.constant dense<0.000000e+00> : vector<32x128xf32>
    %44 = tpu.matmul %43, %42, %cst_18 {dimension_numbers = #tpu.dot_dimension_numbers<[1], [0], [0], [1], [0, 0, 1, 1], [], []>} : vector<32x64xbf16>, vector<64x128xbf16>, vector<32x128xf32> -> vector<32x128xf32>
    %c3 = arith.constant 3 : index
    %c0_19 = arith.constant 0 : index
    %45 = vector.load %arg4[%c3, %c0_19] : memref<16x128xf32, #tpu.memory_space<vmem>>, vector<1x128xf32>
    %46 = vector.broadcast %45 : vector<1x128xf32> to vector<32x128xf32>
    %47 = arith.addf %44, %46 : vector<32x128xf32>
    %c4 = arith.constant 4 : index
    %c0_20 = arith.constant 0 : index
    %48 = vector.load %arg4[%c4, %c0_20] : memref<16x128xf32, #tpu.memory_space<vmem>>, vector<1x128xf32>
    %c5 = arith.constant 5 : index
    %c0_21 = arith.constant 0 : index
    %49 = vector.load %arg4[%c5, %c0_21] : memref<16x128xf32, #tpu.memory_space<vmem>>, vector<1x128xf32>
    %cst_22 = arith.constant dense<0.000000e+00> : vector<32xf32>
    %50 = vector.multi_reduction <add>, %47, %cst_22 [1] : vector<32x128xf32> to vector<32xf32>
    %51 = vector.shape_cast %50 : vector<32xf32> to vector<32x1xf32>
    %52 = arith.mulf %47, %47 : vector<32x128xf32>
    %cst_23 = arith.constant dense<0.000000e+00> : vector<32xf32>
    %53 = vector.multi_reduction <add>, %52, %cst_23 [1] : vector<32x128xf32> to vector<32xf32>
    %54 = vector.shape_cast %53 : vector<32xf32> to vector<32x1xf32>
    %cst_24 = arith.constant 1.562500e-02 : f32
    %55 = vector.broadcast %cst_24 : f32 to vector<32x1xf32>
    %56 = arith.mulf %51, %55 : vector<32x1xf32>
    %cst_25 = arith.constant 1.562500e-02 : f32
    %57 = vector.broadcast %cst_25 : f32 to vector<32x1xf32>
    %58 = arith.mulf %54, %57 : vector<32x1xf32>
    %59 = arith.mulf %56, %56 : vector<32x1xf32>
    %60 = arith.subf %58, %59 : vector<32x1xf32>
    %61 = vector.broadcast %56 : vector<32x1xf32> to vector<32x128xf32>
    %62 = arith.subf %47, %61 : vector<32x128xf32>
    %cst_26 = arith.constant 9.99999974E-6 : f32
    %63 = vector.broadcast %cst_26 : f32 to vector<32x1xf32>
    %64 = arith.addf %60, %63 : vector<32x1xf32>
    %65 = math.rsqrt %64 : vector<32x1xf32>
    %66 = vector.broadcast %65 : vector<32x1xf32> to vector<32x128xf32>
    %67 = arith.mulf %62, %66 : vector<32x128xf32>
    %68 = vector.broadcast %48 : vector<1x128xf32> to vector<32x128xf32>
    %69 = arith.mulf %67, %68 : vector<32x128xf32>
    %70 = vector.broadcast %49 : vector<1x128xf32> to vector<32x128xf32>
    %71 = arith.addf %69, %70 : vector<32x128xf32>
    %cst_27 = arith.constant 0.000000e+00 : f32
    %72 = vector.broadcast %cst_27 : f32 to vector<32x128xf32>
    %73 = arith.maximumf %71, %72 : vector<32x128xf32>
    %74 = vector.extract_strided_slice %73 {offsets = [0, 0], sizes = [32, 64], strides = [1, 1]} : vector<32x128xf32> to vector<32x64xf32>
    %c1_28 = arith.constant 1 : index
    %c0_29 = arith.constant 0 : index
    %c0_30 = arith.constant 0 : index
    %75 = vector.load %arg3[%c1_28, %c0_29, %c0_30] : memref<3x64x128xbf16, #tpu.memory_space<vmem>>, vector<1x64x128xbf16>
    %76 = vector.shape_cast %75 : vector<1x64x128xbf16> to vector<64x128xbf16>
    %77 = arith.truncf %74 : vector<32x64xf32> to vector<32x64xbf16>
    %cst_31 = arith.constant dense<0.000000e+00> : vector<32x128xf32>
    %78 = tpu.matmul %77, %76, %cst_31 {dimension_numbers = #tpu.dot_dimension_numbers<[1], [0], [0], [1], [0, 0, 1, 1], [], []>} : vector<32x64xbf16>, vector<64x128xbf16>, vector<32x128xf32> -> vector<32x128xf32>
    %c6 = arith.constant 6 : index
    %c0_32 = arith.constant 0 : index
    %79 = vector.load %arg4[%c6, %c0_32] : memref<16x128xf32, #tpu.memory_space<vmem>>, vector<1x128xf32>
    %80 = vector.broadcast %79 : vector<1x128xf32> to vector<32x128xf32>
    %81 = arith.addf %78, %80 : vector<32x128xf32>
    %c7 = arith.constant 7 : index
    %c0_33 = arith.constant 0 : index
    %82 = vector.load %arg4[%c7, %c0_33] : memref<16x128xf32, #tpu.memory_space<vmem>>, vector<1x128xf32>
    %c8 = arith.constant 8 : index
    %c0_34 = arith.constant 0 : index
    %83 = vector.load %arg4[%c8, %c0_34] : memref<16x128xf32, #tpu.memory_space<vmem>>, vector<1x128xf32>
    %cst_35 = arith.constant dense<0.000000e+00> : vector<32xf32>
    %84 = vector.multi_reduction <add>, %81, %cst_35 [1] : vector<32x128xf32> to vector<32xf32>
    %85 = vector.shape_cast %84 : vector<32xf32> to vector<32x1xf32>
    %86 = arith.mulf %81, %81 : vector<32x128xf32>
    %cst_36 = arith.constant dense<0.000000e+00> : vector<32xf32>
    %87 = vector.multi_reduction <add>, %86, %cst_36 [1] : vector<32x128xf32> to vector<32xf32>
    %88 = vector.shape_cast %87 : vector<32xf32> to vector<32x1xf32>
    %cst_37 = arith.constant 3.125000e-02 : f32
    %89 = vector.broadcast %cst_37 : f32 to vector<32x1xf32>
    %90 = arith.mulf %85, %89 : vector<32x1xf32>
    %cst_38 = arith.constant 3.125000e-02 : f32
    %91 = vector.broadcast %cst_38 : f32 to vector<32x1xf32>
    %92 = arith.mulf %88, %91 : vector<32x1xf32>
    %93 = arith.mulf %90, %90 : vector<32x1xf32>
    %94 = arith.subf %92, %93 : vector<32x1xf32>
    %95 = vector.broadcast %90 : vector<32x1xf32> to vector<32x128xf32>
    %96 = arith.subf %81, %95 : vector<32x128xf32>
    %cst_39 = arith.constant 9.99999974E-6 : f32
    %97 = vector.broadcast %cst_39 : f32 to vector<32x1xf32>
    %98 = arith.addf %94, %97 : vector<32x1xf32>
    %99 = math.rsqrt %98 : vector<32x1xf32>
    %100 = vector.broadcast %99 : vector<32x1xf32> to vector<32x128xf32>
    %101 = arith.mulf %96, %100 : vector<32x128xf32>
    %102 = vector.broadcast %82 : vector<1x128xf32> to vector<32x128xf32>
    %103 = arith.mulf %101, %102 : vector<32x128xf32>
    %104 = vector.broadcast %83 : vector<1x128xf32> to vector<32x128xf32>
    %105 = arith.addf %103, %104 : vector<32x128xf32>
    %cst_40 = arith.constant 0.000000e+00 : f32
    %106 = vector.broadcast %cst_40 : f32 to vector<32x128xf32>
    %107 = arith.maximumf %105, %106 : vector<32x128xf32>
    %108 = vector.extract_strided_slice %107 {offsets = [0, 0], sizes = [32, 64], strides = [1, 1]} : vector<32x128xf32> to vector<32x64xf32>
    %c2_41 = arith.constant 2 : index
    %c0_42 = arith.constant 0 : index
    %c0_43 = arith.constant 0 : index
    %109 = vector.load %arg3[%c2_41, %c0_42, %c0_43] : memref<3x64x128xbf16, #tpu.memory_space<vmem>>, vector<1x64x128xbf16>
    %110 = vector.shape_cast %109 : vector<1x64x128xbf16> to vector<64x128xbf16>
    %111 = arith.truncf %108 : vector<32x64xf32> to vector<32x64xbf16>
    %cst_44 = arith.constant dense<0.000000e+00> : vector<32x128xf32>
    %112 = tpu.matmul %111, %110, %cst_44 {dimension_numbers = #tpu.dot_dimension_numbers<[1], [0], [0], [1], [0, 0, 1, 1], [], []>} : vector<32x64xbf16>, vector<64x128xbf16>, vector<32x128xf32> -> vector<32x128xf32>
    %c9 = arith.constant 9 : index
    %c0_45 = arith.constant 0 : index
    %113 = vector.load %arg4[%c9, %c0_45] : memref<16x128xf32, #tpu.memory_space<vmem>>, vector<1x128xf32>
    %114 = vector.broadcast %113 : vector<1x128xf32> to vector<32x128xf32>
    %115 = arith.addf %112, %114 : vector<32x128xf32>
    %c10 = arith.constant 10 : index
    %c0_46 = arith.constant 0 : index
    %116 = vector.load %arg4[%c10, %c0_46] : memref<16x128xf32, #tpu.memory_space<vmem>>, vector<1x128xf32>
    %c11 = arith.constant 11 : index
    %c0_47 = arith.constant 0 : index
    %117 = vector.load %arg4[%c11, %c0_47] : memref<16x128xf32, #tpu.memory_space<vmem>>, vector<1x128xf32>
    %cst_48 = arith.constant dense<0.000000e+00> : vector<32xf32>
    %118 = vector.multi_reduction <add>, %115, %cst_48 [1] : vector<32x128xf32> to vector<32xf32>
    %119 = vector.shape_cast %118 : vector<32xf32> to vector<32x1xf32>
    %120 = arith.mulf %115, %115 : vector<32x128xf32>
    %cst_49 = arith.constant dense<0.000000e+00> : vector<32xf32>
    %121 = vector.multi_reduction <add>, %120, %cst_49 [1] : vector<32x128xf32> to vector<32xf32>
    %122 = vector.shape_cast %121 : vector<32xf32> to vector<32x1xf32>
    %cst_50 = arith.constant 3.125000e-02 : f32
    %123 = vector.broadcast %cst_50 : f32 to vector<32x1xf32>
    %124 = arith.mulf %119, %123 : vector<32x1xf32>
    %cst_51 = arith.constant 3.125000e-02 : f32
    %125 = vector.broadcast %cst_51 : f32 to vector<32x1xf32>
    %126 = arith.mulf %122, %125 : vector<32x1xf32>
    %127 = arith.mulf %124, %124 : vector<32x1xf32>
    %128 = arith.subf %126, %127 : vector<32x1xf32>
    %129 = vector.broadcast %124 : vector<32x1xf32> to vector<32x128xf32>
    %130 = arith.subf %115, %129 : vector<32x128xf32>
    %cst_52 = arith.constant 9.99999974E-6 : f32
    %131 = vector.broadcast %cst_52 : f32 to vector<32x1xf32>
    %132 = arith.addf %128, %131 : vector<32x1xf32>
    %133 = math.rsqrt %132 : vector<32x1xf32>
    %134 = vector.broadcast %133 : vector<32x1xf32> to vector<32x128xf32>
    %135 = arith.mulf %130, %134 : vector<32x128xf32>
    %136 = vector.broadcast %116 : vector<1x128xf32> to vector<32x128xf32>
    %137 = arith.mulf %135, %136 : vector<32x128xf32>
    %138 = vector.broadcast %117 : vector<1x128xf32> to vector<32x128xf32>
    %139 = arith.addf %137, %138 : vector<32x128xf32>
    %cst_53 = arith.constant 0.000000e+00 : f32
    %140 = vector.broadcast %cst_53 : f32 to vector<32x128xf32>
    %141 = arith.maximumf %139, %140 : vector<32x128xf32>
    %142 = arith.addf %141, %9 : vector<32x128xf32>
    %cst_54 = arith.constant 0.000000e+00 : f32
    %143 = vector.broadcast %cst_54 : f32 to vector<32x128xf32>
    %144 = arith.maximumf %142, %143 : vector<32x128xf32>
    %c13 = arith.constant 13 : index
    %c0_55 = arith.constant 0 : index
    %145 = vector.load %arg4[%c13, %c0_55] : memref<16x128xf32, #tpu.memory_space<vmem>>, vector<1x128xf32>
    %146 = vector.broadcast %145 : vector<1x128xf32> to vector<32x128xf32>
    %147 = arith.mulf %144, %146 : vector<32x128xf32>
    %cst_56 = arith.constant dense<0.000000e+00> : vector<32xf32>
    %148 = vector.multi_reduction <add>, %147, %cst_56 [1] : vector<32x128xf32> to vector<32xf32>
    %149 = vector.shape_cast %148 : vector<32xf32> to vector<32x1xf32>
    %c14 = arith.constant 14 : index
    %c0_57 = arith.constant 0 : index
    %150 = vector.load %arg4[%c14, %c0_57] : memref<16x128xf32, #tpu.memory_space<vmem>>, vector<1x128xf32>
    %151 = vector.extract_strided_slice %150 {offsets = [0, 0], sizes = [1, 1], strides = [1, 1]} : vector<1x128xf32> to vector<1x1xf32>
    %152 = vector.broadcast %151 : vector<1x1xf32> to vector<32x1xf32>
    %153 = arith.addf %149, %152 : vector<32x1xf32>
    %c0_58 = arith.constant 0 : index
    %c0_59 = arith.constant 0 : index
    %154 = vector.load %arg5[%c0_58, %c0_59] : memref<32x1xf32, #tpu.memory_space<vmem>>, vector<32x1xf32>
    tpu.vector_store %arg5[%c0_58, %c0_59], %153 {strides = array<i32>} : memref<32x1xf32, #tpu.memory_space<vmem>>, vector<32x1xf32>,
    return
  }
  func.func @transform_0(%arg0: i32) -> (i32, i32) {
    %c0_i32 = arith.constant 0 : i32
    %c0_i32_0 = arith.constant 0 : i32
    return %arg0, %c0_i32 : i32, i32
  }
  func.func @transform_1(%arg0: i32) -> (i32, i32) {
    %c0_i32 = arith.constant 0 : i32
    %c0_i32_0 = arith.constant 0 : i32
    %c0_i32_1 = arith.constant 0 : i32
    return %c0_i32, %c0_i32_0 : i32, i32
  }
  func.func @transform_2(%arg0: i32) -> (i32, i32, i32) {
    %c0_i32 = arith.constant 0 : i32
    %c0_i32_0 = arith.constant 0 : i32
    %c0_i32_1 = arith.constant 0 : i32
    %c0_i32_2 = arith.constant 0 : i32
    return %c0_i32, %c0_i32_0, %c0_i32_1 : i32, i32, i32
  }
  func.func @transform_3(%arg0: i32) -> (i32, i32) {
    %c0_i32 = arith.constant 0 : i32
    %c0_i32_0 = arith.constant 0 : i32
    %c0_i32_1 = arith.constant 0 : i32
    return %c0_i32, %c0_i32_0 : i32, i32
  }
  func.func @transform_4(%arg0: i32) -> (i32, i32) {
    %c0_i32 = arith.constant 0 : i32
    %c0_i32_0 = arith.constant 0 : i32
    return %arg0, %c0_i32 : i32, i32
  }
}

</mosaic_0001>

<llo_original>
// kernel: critic_forward.1
$region0: #{critic_forward.1}
  #allocation0 [shape = 'u32[]', space=smem, size = 0x4, offset = 0x4, fixed_abs, tag = 'smem constant byte address 0x4 - core index']
  #allocation1 [shape = 'u32[144,128]{1,0:T(1,128)}', space=vmem, size = 0x12000, scoped, tag = 'internal scratch']
  %s0 = inlined_call_operand.vmem [shape: f32[64,32], index: 0, kind: input, shape index: {}]
  %s1 = inlined_call_operand.vmem [shape: bf16[32,256], index: 1, kind: input, shape index: {}]
  %s2 = inlined_call_operand.vmem [shape: bf16[3,64,128], index: 2, kind: input, shape index: {}]
  %s3 = inlined_call_operand.vmem [shape: f32[16,128], index: 3, kind: input, shape index: {}]
  %s4 = inlined_call_operand.vmem [shape: f32[64,1], index: 4, kind: output, shape index: {}]
  %s5 = sld [smem:[#allocation0]]
  $region49: #{critic_forward.1} parent=0
    _
  %s7 = ssub.s32 1, %s5
  %s8 = scalar_select 0, %s7, %s5
  loop: start=0, step=1, limit=4
  $region2: #{critic_forward.1} parent=0 // loop_pre_header
    _
  $region3: #{critic_forward.1} parent=0 // loop_header
    %s10 = sphi 0, %s14
    %p11 = scmp.ge.s32.totalorder %s10, 4
    %s20 = sphi 0, %s22
    %s23 = sphi 0, %s20
    %s24 = sphi 0, %s23
    %s40 = sphi 0, %s24
    %s44 = sphi 0, %s44
    %s46 = sphi 0, %s44
    %s47 = sphi 0, %s46
    %s61 = sphi 0, %s47
    %s65 = sphi 0, %s65
    %s67 = sphi 0, %s65
    %s68 = sphi 0, %s67
    %s82 = sphi 0, %s68
    %s86 = sphi 0, %s86
    %s88 = sphi 0, %s86
    %s89 = sphi 0, %s88
    %s103 = sphi 0, %s89
    %s109 = sphi 0, %s111
    %s112 = sphi 0, %s109
    %s113 = sphi 0, %s112
    %s129 = sphi 0, %s113
  $region4: #{critic_forward.1} parent=0 // loop_header_branch
    %13 = sbr.rel (%p11) target = $region8
  $region5: #{critic_forward.1} parent=0 // loop_body
    %s15 = ssub.s32 %s10, 1
    %s16 = ssub.s32 %s10, 2
    %s17 = sadd.s32 %s10, 1
    %s18 = ssub.s32 %s10, %s17
    %p19 = scmp.eq.s32.totalorder %s18, 0
    %s21 = sadd.s32 %s20, 1
    %s22 = scalar_select %p19, %s20, %s21
    %p25 = pneg %p19
    %p26 = scmp.eq.s32.totalorder %s10, 1
    %p27 = por %p25, %p26
    %p28 = scmp.ne.s32.totalorder %s20, %s23
    %p29 = scmp.eq.s32.totalorder %s10, 0
    %p30 = por %p28, %p29
    %p31 = scmp.ne.s32.totalorder %s20, %s23
    %p32 = scmp.eq.s32.totalorder %s15, 1
    %p33 = por %p31, %p32
    %p34 = scmp.ne.s32.totalorder %s23, %s24
    %p35 = scmp.eq.s32.totalorder %s15, 0
    %p36 = por %p34, %p35
    %p37 = scmp.ne.s32.totalorder %s23, %s24
    %p38 = scmp.eq.s32.totalorder %s16, 1
    %p39 = por %p37, %p38
    %p41 = scmp.ne.s32.totalorder %s24, %s40
    %p42 = scmp.eq.s32.totalorder %s16, 0
    %p43 = por %p41, %p42
    %s45 = sadd.s32 %s44, 1
    %p48 = scmp.eq.s32.totalorder %s10, 1
    %p49 = scmp.ne.s32.totalorder %s44, %s46
    %p50 = scmp.eq.s32.totalorder %s10, 0
    %p51 = por %p49, %p50
    %p52 = scmp.ne.s32.totalorder %s44, %s46
    %p53 = scmp.eq.s32.totalorder %s15, 1
    %p54 = por %p52, %p53
    %p55 = scmp.ne.s32.totalorder %s46, %s47
    %p56 = scmp.eq.s32.totalorder %s15, 0
    %p57 = por %p55, %p56
    %p58 = scmp.ne.s32.totalorder %s46, %s47
    %p59 = scmp.eq.s32.totalorder %s16, 1
    %p60 = por %p58, %p59
    %p62 = scmp.ne.s32.totalorder %s47, %s61
    %p63 = scmp.eq.s32.totalorder %s16, 0
    %p64 = por %p62, %p63
    %s66 = sadd.s32 %s65, 1
    %p69 = scmp.eq.s32.totalorder %s10, 1
    %p70 = scmp.ne.s32.totalorder %s65, %s67
    %p71 = scmp.eq.s32.totalorder %s10, 0
    %p72 = por %p70, %p71
    %p73 = scmp.ne.s32.totalorder %s65, %s67
    %p74 = scmp.eq.s32.totalorder %s15, 1
    %p75 = por %p73, %p74
    %p76 = scmp.ne.s32.totalorder %s67, %s68
    %p77 = scmp.eq.s32.totalorder %s15, 0
    %p78 = por %p76, %p77
    %p79 = scmp.ne.s32.totalorder %s67, %s68
    %p80 = scmp.eq.s32.totalorder %s16, 1
    %p81 = por %p79, %p80
    %p83 = scmp.ne.s32.totalorder %s68, %s82
    %p84 = scmp.eq.s32.totalorder %s16, 0
    %p85 = por %p83, %p84
    %s87 = sadd.s32 %s86, 1
    %p90 = scmp.eq.s32.totalorder %s10, 1
    %p91 = scmp.ne.s32.totalorder %s86, %s88
    %p92 = scmp.eq.s32.totalorder %s10, 0
    %p93 = por %p91, %p92
    %p94 = scmp.ne.s32.totalorder %s86, %s88
    %p95 = scmp.eq.s32.totalorder %s15, 1
    %p96 = por %p94, %p95
    %p97 = scmp.ne.s32.totalorder %s88, %s89
    %p98 = scmp.eq.s32.totalorder %s15, 0
    %p99 = por %p97, %p98
    %p100 = scmp.ne.s32.totalorder %s88, %s89
    %p101 = scmp.eq.s32.totalorder %s16, 1
    %p102 = por %p100, %p101
    %p104 = scmp.ne.s32.totalorder %s89, %s103
    %p105 = scmp.eq.s32.totalorder %s16, 0
    %p106 = por %p104, %p105
    %s107 = ssub.s32 %s10, %s17
    %p108 = scmp.eq.s32.totalorder %s107, 0
    %s110 = sadd.s32 %s109, 1
    %s111 = scalar_select %p108, %s109, %s110
    %p114 = pneg %p108
    %p115 = scmp.eq.s32.totalorder %s10, 1
    %p116 = por %p114, %p115
    %p117 = scmp.ne.s32.totalorder %s109, %s112
    %p118 = scmp.eq.s32.totalorder %s10, 0
    %p119 = por %p117, %p118
    %p120 = scmp.ne.s32.totalorder %s109, %s112
    %p121 = scmp.eq.s32.totalorder %s15, 1
    %p122 = por %p120, %p121
    %p123 = scmp.ne.s32.totalorder %s112, %s113
    %p124 = scmp.eq.s32.totalorder %s15, 0
    %p125 = por %p123, %p124
    %p126 = scmp.ne.s32.totalorder %s112, %s113
    %p127 = scmp.eq.s32.totalorder %s16, 1
    %p128 = por %p126, %p127
    %p130 = scmp.ne.s32.totalorder %s113, %s129
    %p131 = scmp.eq.s32.totalorder %s16, 0
    %p132 = por %p130, %p131
    %p133 = scmp.le.s32.totalorder 1, %s10
    %p134 = scmp.lt.s32.totalorder %s10, 3
    %p135 = pnand %p133, %p134
    %p136 = pneg %p135
    // Predicated region
    $region9: #{critic_forward.1} parent=5 // pred_check
      _
    $region10: #{critic_forward.1} parent=5 // pred_check_branch
      %138 = sbr.rel (%p135) target = $region12
    $region11: #{critic_forward.1} parent=5 // pred_region
      %s139 = ssub.s32 %s10, 1
      // Predicated region
      $region13: #{critic_forward.1} parent=11 // pred_check
        %p140 = pneg %p57
      $region14: #{critic_forward.1} parent=11 // pred_check_branch
        %142 = sbr.rel (%p140) target = $region16
      $region15: #{critic_forward.1} parent=11 // pred_region
        _
      $region16: #{critic_forward.1} parent=11 // pred_fallthru
        _
      // Predicated region
      $region17: #{critic_forward.1} parent=11 // pred_check
        %p143 = pneg %p78
      $region18: #{critic_forward.1} parent=11 // pred_check_branch
        %145 = sbr.rel (%p143) target = $region20
      $region19: #{critic_forward.1} parent=11 // pred_region
        _
      $region20: #{critic_forward.1} parent=11 // pred_fallthru
        _
      // Predicated region
      $region21: #{critic_forward.1} parent=11 // pred_check
        %p146 = pneg %p99
      $region22: #{critic_forward.1} parent=11 // pred_check_branch
        %148 = sbr.rel (%p146) target = $region24
      $region23: #{critic_forward.1} parent=11 // pred_region
        _
      $region24: #{critic_forward.1} parent=11 // pred_fallthru
        _
    $region12: #{critic_forward.1} parent=5 // pred_fallthru
      _
    %p149 = scmp.lt.s32.totalorder %s10, 2
    // Predicated region
    $region25: #{critic_forward.1} parent=5 // pred_check
      %p150 = pneg %p149
    $region26: #{critic_forward.1} parent=5 // pred_check_branch
      %152 = sbr.rel (%p150) target = $region28
    $region27: #{critic_forward.1} parent=5 // pred_region
      // Predicated region
      $region29: #{critic_forward.1} parent=27 // pred_check
        %p153 = pneg %p30
      $region30: #{critic_forward.1} parent=27 // pred_check_branch
        %155 = sbr.rel (%p153) target = $region32
      $region31: #{critic_forward.1} parent=27 // pred_region
        %s156 = smul.u32 4, %s10
        %p157 = scmp.lt.s32.totalorder %s156, 7
        %s158 = scalar_select %p157, %s156, 7
        %s159 = smul.addr %s158, 8
        %s160 = scalar_lea.vmem %s0, %s159
        %s161 = smul.u32 4, %s10
      $region32: #{critic_forward.1} parent=27 // pred_fallthru
        _
    $region28: #{critic_forward.1} parent=5 // pred_fallthru
      _
    %p162 = scmp.le.s32.totalorder 1, %s10
    %p163 = scmp.lt.s32.totalorder %s10, 3
    %p164 = pnand %p162, %p163
    %p165 = pneg %p164
    // Predicated region
    $region33: #{critic_forward.1} parent=5 // pred_check
      _
    $region34: #{critic_forward.1} parent=5 // pred_check_branch
      %167 = sbr.rel (%p164) target = $region36
    $region35: #{critic_forward.1} parent=5 // pred_region
      %s168 = ssub.s32 %s10, 1
      %s169 = smul.u32 4, %s15
      %p170 = scmp.lt.s32.totalorder %s169, 7
      %s171 = scalar_select %p170, %s169, 7
      %s172 = smul.addr %s171, 8
      %s173 = scalar_lea.vmem %s0, %s172
      %p174 = pneg %p36
      %p175 = pneg %p33
      %p176 = pneg %p57
      %p177 = pneg %p54
      %p178 = pneg %p78
      %p179 = pneg %p75
      %p180 = pneg %p99
      %p181 = pneg %p96
      %p182 = pneg %p125
      %p183 = pneg %p122
      %s184 = smul.u32 4, %s15
      %p185 = scmp.lt.s32.totalorder %s184, 7
      %s186 = scalar_select %p185, %s184, 7
      %s187 = smul.addr %s186, 8
      %s188 = scalar_lea.vmem %s4, %s187
      %s189 = smul.u32 4, %s15
      %p190 = scmp.lt.s32.totalorder %s189, 7
      %s191 = scalar_select %p190, %s189, 7
      %s192 = smul.addr %s191, 8
      %s193 = scalar_lea.vmem %s0, %s192
      %s194 = smul.u32 4, %s15
      %s195 = smul.u32 4, %s15
      %p196 = scmp.lt.s32.totalorder %s195, 7
      %s197 = scalar_select %p196, %s195, 7
      %s198 = smul.addr %s197, 8
      %s199 = scalar_lea.vmem %s4, %s198
      %s200 = smul.u32 4, %s15
      %v202 = vld [vmem:[%s193] sm:$0xff]
      %v203 = vld [vmem:[%s193 + $0x8] sm:$0xff]
      %v204 = vld [vmem:[%s193 + $0x10] sm:$0xff]
      %v205 = vld [vmem:[%s193 + $0x18] sm:$0xff]
      %v206 = vld [vmem:[%s1] sm:$0xff]
      %v207 = vld [vmem:[%s1 + $0x8] sm:$0xff]
      %v208 = vld [vmem:[%s1 + $0x10] sm:$0xff]
      %v209 = vld [vmem:[%s1 + $0x18] sm:$0xff]
      %v210 = vpack.c.bf16 %v203, %v202
      %v211 = vpack.c.bf16 %v205, %v204
      %v216 = vunpack.c.l.b16 %v206
      %v217 = vunpack.c.h.b16 %v206
      %v218 = vunpack.c.l.b16 %v207
      %v219 = vunpack.c.h.b16 %v207
      %v220 = vunpack.c.l.b16 %v208
      %v221 = vunpack.c.h.b16 %v208
      %v222 = vunpack.c.l.b16 %v209
      %v223 = vunpack.c.h.b16 %v209
      %v224 = vpack.c.b16 %v218, %v216
      %v225 = vpack.c.b16 %v219, %v217
      %v226 = vpack.c.b16 %v222, %v220
      %v227 = vpack.c.b16 %v223, %v221
      %vm232 = vcmask 261120
      %v234 = vsel %vm232, %v210, 0
      %v237 = vsel %vm232, %v211, 0
      %239 = vmatprep.subr.bf16.mxu0 %v225
      %240 = vmatpush1.bf16.msra.mxu0 %v224
      %241 = vmatprep.subr.bf16.mxu0 %v227
      %242 = vmatpush1.bf16.msra.mxu0 %v226
      %243 = vmatprep.subr.bf16.mxu0 0
      %244 = vmatpush1.bf16.msra.mxu0 0
      %245 = vmatprep.subr.bf16.mxu0 0
      %246 = vmatpush1.bf16.msra.mxu0 0
      %247 = vmatprep.subr.bf16.mxu0 0
      %248 = vmatpush1.bf16.msra.mxu0 0
      %249 = vmatprep.subr.bf16.mxu0 0
      %250 = vmatpush1.bf16.msra.mxu0 0
      %251 = vmatprep.subr.bf16.mxu0 0
      %252 = vmatpush1.bf16.msra.mxu0 0
      %253 = vmatprep.subr.bf16.mxu0 0
      %254 = vmatpush1.bf16.msra.mxu0 0
      %255 = vmatprep.subr.bf16.mxu0 0
      %256 = vmatpush1.bf16.msra.mxu0 0
      %257 = vmatprep.subr.bf16.mxu0 0
      %258 = vmatpush1.bf16.msra.mxu0 0
      %259 = vmatprep.subr.bf16.mxu0 0
      %260 = vmatpush1.bf16.msra.mxu0 0
      %261 = vmatprep.subr.bf16.mxu0 0
      %262 = vmatpush1.bf16.msra.mxu0 0
      %263 = vmatprep.subr.bf16.mxu0 0
      %264 = vmatpush1.bf16.msra.mxu0 0
      %265 = vmatprep.subr.bf16.mxu0 0
      %266 = vmatpush1.bf16.msra.mxu0 0
      %267 = vmatprep.subr.bf16.mxu0 0
      %268 = vmatpush1.bf16.msra.mxu0 0
      %269 = vmatprep.subr.bf16.mxu0 0
      %270 = vmatpush1.bf16.msra.mxu0 0
      %271 = vmatprep.mubr.bf16.mxu0 0
      %272 = vmatmul.mubr.bf16.gmra.mrb[0].mxu0 %v234
      %v273 = vpop.f32.mrb[0].mxu0
      %v274 = vadd.f32 0.0, %v273
      %v275 = vpop.f32.mrb[0].mxu0
      %v276 = vadd.f32 0.0, %v275
      %v277 = vpop.f32.mrb[0].mxu0
      %v278 = vadd.f32 0.0, %v277
      %v279 = vpop.f32.mrb[0].mxu0
      %v280 = vadd.f32 0.0, %v279
      %281 = vmatprep.mubr.bf16.mxu0 0
      %282 = vmatmul.mubr.bf16.gmra.mrb[0].mxu0 %v237
      %v283 = vpop.f32.mrb[0].mxu0
      %v284 = vadd.f32 0.0, %v283
      %v285 = vpop.f32.mrb[0].mxu0
      %v286 = vadd.f32 0.0, %v285
      %v287 = vpop.f32.mrb[0].mxu0
      %v288 = vadd.f32 0.0, %v287
      %v289 = vpop.f32.mrb[0].mxu0
      %v290 = vadd.f32 0.0, %v289
      %291 = vdwg.mxu0
      %v292 = vld [vmem:[%s3 + $0xc] sm:$0x1]
      %v293 = vlaneseq
      %v294 = vshrl.u32 %v293, 7
      %v295 = vsub.s32 0, %v294
      %v296 = vrot.slane %v292, %v295
      %v297 = vadd.f32 %v276, %v296
      %v298 = vadd.f32 %v280, %v296
      %v299 = vadd.f32 %v286, %v296
      %v300 = vadd.f32 %v290, %v296
      %v301 = vmax.f32 %v297, 0.0
      %v302 = vmax.f32 %v298, 0.0
      %v303 = vmax.f32 %v299, 0.0
      %v304 = vmax.f32 %v300, 0.0
      %v305 = vld [vmem:[%s3] sm:$0x1]
      %v306 = vlaneseq
      %v307 = vshrl.u32 %v306, 7
      %v308 = vsub.s32 0, %v307
      %v309 = vrot.slane %v305, %v308
      %v310 = vadd.f32 %v274, %v309
      %v311 = vadd.f32 %v278, %v309
      %v312 = vadd.f32 %v284, %v309
      %v313 = vadd.f32 %v288, %v309
      %v314 = vld [vmem:[%s3 + $0x1] sm:$0x1]
      %v315 = vld [vmem:[%s3 + $0x2] sm:$0x1]
      %316 = vadd.xlane.f32.xlu0 %v310
      %v317 = vpop.xlane.xlu0 %316
      %318 = vadd.xlane.f32.xlu0 %v311
      %v319 = vpop.xlane.xlu0 %318
      %320 = vadd.xlane.f32.xlu0 %v312
      %v321 = vpop.xlane.xlu0 %320
      %322 = vadd.xlane.f32.xlu0 %v313
      %v323 = vpop.xlane.xlu0 %322
      %v324 = vmul.f32 %v310, %v310
      %v325 = vmul.f32 %v311, %v311
      %v326 = vmul.f32 %v312, %v312
      %v327 = vmul.f32 %v313, %v313
      %328 = vadd.xlane.f32.xlu0 %v324
      %v329 = vpop.xlane.xlu0 %328
      %330 = vadd.xlane.f32.xlu0 %v325
      %v331 = vpop.xlane.xlu0 %330
      %332 = vadd.xlane.f32.xlu0 %v326
      %v333 = vpop.xlane.xlu0 %332
      %334 = vadd.xlane.f32.xlu0 %v327
      %v335 = vpop.xlane.xlu0 %334
      %v336 = vmul.f32 %v317, 0.015625
      %v337 = vmul.f32 %v319, 0.015625
      %v338 = vmul.f32 %v321, 0.015625
      %v339 = vmul.f32 %v323, 0.015625
      %v340 = vmul.f32 %v329, 0.015625
      %v341 = vmul.f32 %v331, 0.015625
      %v342 = vmul.f32 %v333, 0.015625
      %v343 = vmul.f32 %v335, 0.015625
      %v344 = vmul.f32 %v336, %v336
      %v345 = vmul.f32 %v337, %v337
      %v346 = vmul.f32 %v338, %v338
      %v347 = vmul.f32 %v339, %v339
      %v348 = vsub.f32 %v340, %v344
      %v349 = vsub.f32 %v341, %v345
      %v350 = vsub.f32 %v342, %v346
      %v351 = vsub.f32 %v343, %v347
      %v352 = vsub.f32 %v310, %v336
      %v353 = vsub.f32 %v311, %v337
      %v354 = vsub.f32 %v312, %v338
      %v355 = vsub.f32 %v313, %v339
      %v356 = vadd.f32 %v348, 1e-05
      %v357 = vadd.f32 %v349, 1e-05
      %v358 = vadd.f32 %v350, 1e-05
      %v359 = vadd.f32 %v351, 1e-05
      %v360 = vrsqrt.pop %v356
      %v361 = vrsqrt.pop %v357
      %v362 = vrsqrt.pop %v358
      %v363 = vrsqrt.pop %v359
      %v364 = vmul.f32 %v352, %v360
      %v365 = vmul.f32 %v353, %v361
      %v366 = vmul.f32 %v354, %v362
      %v367 = vmul.f32 %v355, %v363
      %v368 = vlaneseq
      %v369 = vshrl.u32 %v368, 7
      %v370 = vsub.s32 0, %v369
      %v371 = vrot.slane %v314, %v370
      %v372 = vmul.f32 %v364, %v371
      %v373 = vmul.f32 %v365, %v371
      %v374 = vmul.f32 %v366, %v371
      %v375 = vmul.f32 %v367, %v371
      %v376 = vlaneseq
      %v377 = vshrl.u32 %v376, 7
      %v378 = vsub.s32 0, %v377
      %v379 = vrot.slane %v315, %v378
      %v380 = vadd.f32 %v372, %v379
      %v381 = vadd.f32 %v373, %v379
      %v382 = vadd.f32 %v374, %v379
      %v383 = vadd.f32 %v375, %v379
      %v384 = vmax.f32 %v380, 0.0
      %v385 = vmax.f32 %v381, 0.0
      %v386 = vmax.f32 %v382, 0.0
      %v387 = vmax.f32 %v383, 0.0
      %v388 = vld [vmem:[%s2] sm:$0xf]
      %v389 = vld [vmem:[%s2 + $0x4] sm:$0xf]
      %v390 = vld [vmem:[%s2 + $0x8] sm:$0xf]
      %v391 = vld [vmem:[%s2 + $0xc] sm:$0xf]
      %v392 = vld [vmem:[%s2 + $0x10] sm:$0xf]
      %v393 = vld [vmem:[%s2 + $0x14] sm:$0xf]
      %v394 = vld [vmem:[%s2 + $0x18] sm:$0xf]
      %v395 = vld [vmem:[%s2 + $0x1c] sm:$0xf]
      %v396 = vpack.c.bf16 %v385, %v384
      %v397 = vpack.c.bf16 %v387, %v386
      %v398 = vld [vmem:[%s3 + $0x3] sm:$0x1]
      %v399 = vlaneseq
      %v400 = vshrl.u32 %v399, 7
      %v401 = vsub.s32 0, %v400
      %v402 = vrot.slane %v398, %v401
      %v411 = vunpack.c.l.b16 %v388
      %v412 = vunpack.c.l.b16 %v389
      %v413 = vunpack.c.l.b16 %v390
      %v414 = vunpack.c.l.b16 %v391
      %v415 = vunpack.c.l.b16 %v392
      %v416 = vunpack.c.l.b16 %v393
      %v417 = vunpack.c.l.b16 %v394
      %v418 = vunpack.c.l.b16 %v395
      %v419 = vpack.c.b16 %v412, %v411
      %v420 = vpack.c.b16 %v414, %v413
      %v421 = vpack.c.b16 %v416, %v415
      %v422 = vpack.c.b16 %v418, %v417
      %vm427 = vcmask 523264
      %v429 = vsel %vm427, %v396, 0
      %v432 = vsel %vm427, %v397, 0
      %434 = vmatprep.subr.bf16.mxu0 0
      %435 = vmatpush1.bf16.msra.mxu0 %v419
      %436 = vmatprep.subr.bf16.mxu0 0
      %437 = vmatpush1.bf16.msra.mxu0 %v420
      %438 = vmatprep.subr.bf16.mxu0 0
      %439 = vmatpush1.bf16.msra.mxu0 %v421
      %440 = vmatprep.subr.bf16.mxu0 0
      %441 = vmatpush1.bf16.msra.mxu0 %v422
      %442 = vmatprep.subr.bf16.mxu0 0
      %443 = vmatpush1.bf16.msra.mxu0 0
      %444 = vmatprep.subr.bf16.mxu0 0
      %445 = vmatpush1.bf16.msra.mxu0 0
      %446 = vmatprep.subr.bf16.mxu0 0
      %447 = vmatpush1.bf16.msra.mxu0 0
      %448 = vmatprep.subr.bf16.mxu0 0
      %449 = vmatpush1.bf16.msra.mxu0 0
      %450 = vmatprep.subr.bf16.mxu0 0
      %451 = vmatpush1.bf16.msra.mxu0 0
      %452 = vmatprep.subr.bf16.mxu0 0
      %453 = vmatpush1.bf16.msra.mxu0 0
      %454 = vmatprep.subr.bf16.mxu0 0
      %455 = vmatpush1.bf16.msra.mxu0 0
      %456 = vmatprep.subr.bf16.mxu0 0
      %457 = vmatpush1.bf16.msra.mxu0 0
      %458 = vmatprep.subr.bf16.mxu0 0
      %459 = vmatpush1.bf16.msra.mxu0 0
      %460 = vmatprep.subr.bf16.mxu0 0
      %461 = vmatpush1.bf16.msra.mxu0 0
      %462 = vmatprep.subr.bf16.mxu0 0
      %463 = vmatpush1.bf16.msra.mxu0 0
      %464 = vmatprep.subr.bf16.mxu0 0
      %465 = vmatpush1.bf16.msra.mxu0 0
      %466 = vmatprep.mubr.bf16.mxu0 0
      %467 = vmatmul.mubr.bf16.gmra.mrb[0].mxu0 %v429
      %v468 = vpop.f32.mrb[0].mxu0
      %v469 = vadd.f32 %v402, %v468
      %v470 = vpop.f32.mrb[0].mxu0
      %v471 = vpop.f32.mrb[0].mxu0
      %v472 = vadd.f32 %v402, %v471
      %v473 = vpop.f32.mrb[0].mxu0
      %474 = vmatprep.mubr.bf16.mxu0 0
      %475 = vmatmul.mubr.bf16.gmra.mrb[0].mxu0 %v432
      %v476 = vpop.f32.mrb[0].mxu0
      %v477 = vadd.f32 %v402, %v476
      %v478 = vpop.f32.mrb[0].mxu0
      %v479 = vpop.f32.mrb[0].mxu0
      %v480 = vadd.f32 %v402, %v479
      %v481 = vpop.f32.mrb[0].mxu0
      %482 = vdwg.mxu0
      %v483 = vld [vmem:[%s3 + $0x4] sm:$0x1]
      %v484 = vld [vmem:[%s3 + $0x5] sm:$0x1]
      %485 = vadd.xlane.f32.xlu0 %v469
      %v486 = vpop.xlane.xlu0 %485
      %487 = vadd.xlane.f32.xlu0 %v472
      %v488 = vpop.xlane.xlu0 %487
      %489 = vadd.xlane.f32.xlu0 %v477
      %v490 = vpop.xlane.xlu0 %489
      %491 = vadd.xlane.f32.xlu0 %v480
      %v492 = vpop.xlane.xlu0 %491
      %v493 = vmul.f32 %v469, %v469
      %v494 = vmul.f32 %v472, %v472
      %v495 = vmul.f32 %v477, %v477
      %v496 = vmul.f32 %v480, %v480
      %497 = vadd.xlane.f32.xlu0 %v493
      %v498 = vpop.xlane.xlu0 %497
      %499 = vadd.xlane.f32.xlu0 %v494
      %v500 = vpop.xlane.xlu0 %499
      %501 = vadd.xlane.f32.xlu0 %v495
      %v502 = vpop.xlane.xlu0 %501
      %503 = vadd.xlane.f32.xlu0 %v496
      %v504 = vpop.xlane.xlu0 %503
      %v505 = vmul.f32 %v486, 0.015625
      %v506 = vmul.f32 %v488, 0.015625
      %v507 = vmul.f32 %v490, 0.015625
      %v508 = vmul.f32 %v492, 0.015625
      %v509 = vmul.f32 %v498, 0.015625
      %v510 = vmul.f32 %v500, 0.015625
      %v511 = vmul.f32 %v502, 0.015625
      %v512 = vmul.f32 %v504, 0.015625
      %v513 = vmul.f32 %v505, %v505
      %v514 = vmul.f32 %v506, %v506
      %v515 = vmul.f32 %v507, %v507
      %v516 = vmul.f32 %v508, %v508
      %v517 = vsub.f32 %v509, %v513
      %v518 = vsub.f32 %v510, %v514
      %v519 = vsub.f32 %v511, %v515
      %v520 = vsub.f32 %v512, %v516
      %v521 = vsub.f32 %v469, %v505
      %v522 = vsub.f32 %v472, %v506
      %v523 = vsub.f32 %v477, %v507
      %v524 = vsub.f32 %v480, %v508
      %v525 = vadd.f32 %v517, 1e-05
      %v526 = vadd.f32 %v518, 1e-05
      %v527 = vadd.f32 %v519, 1e-05
      %v528 = vadd.f32 %v520, 1e-05
      %v529 = vrsqrt.pop %v525
      %v530 = vrsqrt.pop %v526
      %v531 = vrsqrt.pop %v527
      %v532 = vrsqrt.pop %v528
      %v533 = vmul.f32 %v521, %v529
      %v534 = vmul.f32 %v522, %v530
      %v535 = vmul.f32 %v523, %v531
      %v536 = vmul.f32 %v524, %v532
      %v537 = vlaneseq
      %v538 = vshrl.u32 %v537, 7
      %v539 = vsub.s32 0, %v538
      %v540 = vrot.slane %v483, %v539
      %v541 = vmul.f32 %v533, %v540
      %v542 = vmul.f32 %v534, %v540
      %v543 = vmul.f32 %v535, %v540
      %v544 = vmul.f32 %v536, %v540
      %v545 = vlaneseq
      %v546 = vshrl.u32 %v545, 7
      %v547 = vsub.s32 0, %v546
      %v548 = vrot.slane %v484, %v547
      %v549 = vadd.f32 %v541, %v548
      %v550 = vadd.f32 %v542, %v548
      %v551 = vadd.f32 %v543, %v548
      %v552 = vadd.f32 %v544, %v548
      %v553 = vmax.f32 %v549, 0.0
      %v554 = vmax.f32 %v550, 0.0
      %v555 = vmax.f32 %v551, 0.0
      %v556 = vmax.f32 %v552, 0.0
      %s557 = scalar_lea.vmem %s2, 32
      %v558 = vld [vmem:[%s557] sm:$0xf]
      %v559 = vld [vmem:[%s557 + $0x4] sm:$0xf]
      %v560 = vld [vmem:[%s557 + $0x8] sm:$0xf]
      %v561 = vld [vmem:[%s557 + $0xc] sm:$0xf]
      %v562 = vld [vmem:[%s557 + $0x10] sm:$0xf]
      %v563 = vld [vmem:[%s557 + $0x14] sm:$0xf]
      %v564 = vld [vmem:[%s557 + $0x18] sm:$0xf]
      %v565 = vld [vmem:[%s557 + $0x1c] sm:$0xf]
      %v566 = vpack.c.bf16 %v554, %v553
      %v567 = vpack.c.bf16 %v556, %v555
      %v568 = vld [vmem:[%s3 + $0x6] sm:$0x1]
      %v569 = vlaneseq
      %v570 = vshrl.u32 %v569, 7
      %v571 = vsub.s32 0, %v570
      %v572 = vrot.slane %v568, %v571
      %v581 = vunpack.c.l.b16 %v558
      %v582 = vunpack.c.l.b16 %v559
      %v583 = vunpack.c.l.b16 %v560
      %v584 = vunpack.c.l.b16 %v561
      %v585 = vunpack.c.l.b16 %v562
      %v586 = vunpack.c.l.b16 %v563
      %v587 = vunpack.c.l.b16 %v564
      %v588 = vunpack.c.l.b16 %v565
      %v589 = vpack.c.b16 %v582, %v581
      %v590 = vpack.c.b16 %v584, %v583
      %v591 = vpack.c.b16 %v586, %v585
      %v592 = vpack.c.b16 %v588, %v587
      %v598 = vsel %vm427, %v566, 0
      %v601 = vsel %vm427, %v567, 0
      %603 = vmatprep.subr.bf16.mxu0 0
      %604 = vmatpush1.bf16.msra.mxu0 %v589
      %605 = vmatprep.subr.bf16.mxu0 0
      %606 = vmatpush1.bf16.msra.mxu0 %v590
      %607 = vmatprep.subr.bf16.mxu0 0
      %608 = vmatpush1.bf16.msra.mxu0 %v591
      %609 = vmatprep.subr.bf16.mxu0 0
      %610 = vmatpush1.bf16.msra.mxu0 %v592
      %611 = vmatprep.subr.bf16.mxu0 0
      %612 = vmatpush1.bf16.msra.mxu0 0
      %613 = vmatprep.subr.bf16.mxu0 0
      %614 = vmatpush1.bf16.msra.mxu0 0
      %615 = vmatprep.subr.bf16.mxu0 0
      %616 = vmatpush1.bf16.msra.mxu0 0
      %617 = vmatprep.subr.bf16.mxu0 0
      %618 = vmatpush1.bf16.msra.mxu0 0
      %619 = vmatprep.subr.bf16.mxu0 0
      %620 = vmatpush1.bf16.msra.mxu0 0
      %621 = vmatprep.subr.bf16.mxu0 0
      %622 = vmatpush1.bf16.msra.mxu0 0
      %623 = vmatprep.subr.bf16.mxu0 0
      %624 = vmatpush1.bf16.msra.mxu0 0
      %625 = vmatprep.subr.bf16.mxu0 0
      %626 = vmatpush1.bf16.msra.mxu0 0
      %627 = vmatprep.subr.bf16.mxu0 0
      %628 = vmatpush1.bf16.msra.mxu0 0
      %629 = vmatprep.subr.bf16.mxu0 0
      %630 = vmatpush1.bf16.msra.mxu0 0
      %631 = vmatprep.subr.bf16.mxu0 0
      %632 = vmatpush1.bf16.msra.mxu0 0
      %633 = vmatprep.subr.bf16.mxu0 0
      %634 = vmatpush1.bf16.msra.mxu0 0
      %635 = vmatprep.mubr.bf16.mxu0 0
      %636 = vmatmul.mubr.bf16.gmra.mrb[0].mxu0 %v598
      %v637 = vpop.f32.mrb[0].mxu0
      %v638 = vadd.f32 %v572, %v637
      %v639 = vpop.f32.mrb[0].mxu0
      %v640 = vpop.f32.mrb[0].mxu0
      %v641 = vadd.f32 %v572, %v640
      %v642 = vpop.f32.mrb[0].mxu0
      %643 = vmatprep.mubr.bf16.mxu0 0
      %644 = vmatmul.mubr.bf16.gmra.mrb[0].mxu0 %v601
      %v645 = vpop.f32.mrb[0].mxu0
      %v646 = vadd.f32 %v572, %v645
      %v647 = vpop.f32.mrb[0].mxu0
      %v648 = vpop.f32.mrb[0].mxu0
      %v649 = vadd.f32 %v572, %v648
      %v650 = vpop.f32.mrb[0].mxu0
      %651 = vdwg.mxu0
      %v652 = vld [vmem:[%s3 + $0x7] sm:$0x1]
      %v653 = vld [vmem:[%s3 + $0x8] sm:$0x1]
      %654 = vadd.xlane.f32.xlu0 %v638
      %v655 = vpop.xlane.xlu0 %654
      %656 = vadd.xlane.f32.xlu0 %v641
      %v657 = vpop.xlane.xlu0 %656
      %658 = vadd.xlane.f32.xlu0 %v646
      %v659 = vpop.xlane.xlu0 %658
      %660 = vadd.xlane.f32.xlu0 %v649
      %v661 = vpop.xlane.xlu0 %660
      %v662 = vmul.f32 %v638, %v638
      %v663 = vmul.f32 %v641, %v641
      %v664 = vmul.f32 %v646, %v646
      %v665 = vmul.f32 %v649, %v649
      %666 = vadd.xlane.f32.xlu0 %v662
      %v667 = vpop.xlane.xlu0 %666
      %668 = vadd.xlane.f32.xlu0 %v663
      %v669 = vpop.xlane.xlu0 %668
      %670 = vadd.xlane.f32.xlu0 %v664
      %v671 = vpop.xlane.xlu0 %670
      %672 = vadd.xlane.f32.xlu0 %v665
      %v673 = vpop.xlane.xlu0 %672
      %v674 = vmul.f32 %v655, 0.03125
      %v675 = vmul.f32 %v657, 0.03125
      %v676 = vmul.f32 %v659, 0.03125
      %v677 = vmul.f32 %v661, 0.03125
      %v678 = vmul.f32 %v667, 0.03125
      %v679 = vmul.f32 %v669, 0.03125
      %v680 = vmul.f32 %v671, 0.03125
      %v681 = vmul.f32 %v673, 0.03125
      %v682 = vmul.f32 %v674, %v674
      %v683 = vmul.f32 %v675, %v675
      %v684 = vmul.f32 %v676, %v676
      %v685 = vmul.f32 %v677, %v677
      %v686 = vsub.f32 %v678, %v682
      %v687 = vsub.f32 %v679, %v683
      %v688 = vsub.f32 %v680, %v684
      %v689 = vsub.f32 %v681, %v685
      %v690 = vsub.f32 %v638, %v674
      %v691 = vsub.f32 %v641, %v675
      %v692 = vsub.f32 %v646, %v676
      %v693 = vsub.f32 %v649, %v677
      %v694 = vadd.f32 %v686, 1e-05
      %v695 = vadd.f32 %v687, 1e-05
      %v696 = vadd.f32 %v688, 1e-05
      %v697 = vadd.f32 %v689, 1e-05
      %v698 = vrsqrt.pop %v694
      %v699 = vrsqrt.pop %v695
      %v700 = vrsqrt.pop %v696
      %v701 = vrsqrt.pop %v697
      %v702 = vmul.f32 %v690, %v698
      %v703 = vmul.f32 %v691, %v699
      %v704 = vmul.f32 %v692, %v700
      %v705 = vmul.f32 %v693, %v701
      %v706 = vlaneseq
      %v707 = vshrl.u32 %v706, 7
      %v708 = vsub.s32 0, %v707
      %v709 = vrot.slane %v652, %v708
      %v710 = vmul.f32 %v702, %v709
      %v711 = vmul.f32 %v703, %v709
      %v712 = vmul.f32 %v704, %v709
      %v713 = vmul.f32 %v705, %v709
      %v714 = vlaneseq
      %v715 = vshrl.u32 %v714, 7
      %v716 = vsub.s32 0, %v715
      %v717 = vrot.slane %v653, %v716
      %v718 = vadd.f32 %v710, %v717
      %v719 = vadd.f32 %v711, %v717
      %v720 = vadd.f32 %v712, %v717
      %v721 = vadd.f32 %v713, %v717
      %v722 = vmax.f32 %v718, 0.0
      %v723 = vmax.f32 %v719, 0.0
      %v724 = vmax.f32 %v720, 0.0
      %v725 = vmax.f32 %v721, 0.0
      %s726 = scalar_lea.vmem %s2, 64
      %v727 = vld [vmem:[%s726] sm:$0xf]
      %v728 = vld [vmem:[%s726 + $0x4] sm:$0xf]
      %v729 = vld [vmem:[%s726 + $0x8] sm:$0xf]
      %v730 = vld [vmem:[%s726 + $0xc] sm:$0xf]
      %v731 = vld [vmem:[%s726 + $0x10] sm:$0xf]
      %v732 = vld [vmem:[%s726 + $0x14] sm:$0xf]
      %v733 = vld [vmem:[%s726 + $0x18] sm:$0xf]
      %v734 = vld [vmem:[%s726 + $0x1c] sm:$0xf]
      %v735 = vpack.c.bf16 %v723, %v722
      %v736 = vpack.c.bf16 %v725, %v724
      %v737 = vld [vmem:[%s3 + $0x9] sm:$0x1]
      %v738 = vlaneseq
      %v739 = vshrl.u32 %v738, 7
      %v740 = vsub.s32 0, %v739
      %v741 = vrot.slane %v737, %v740
      %v750 = vunpack.c.l.b16 %v727
      %v751 = vunpack.c.l.b16 %v728
      %v752 = vunpack.c.l.b16 %v729
      %v753 = vunpack.c.l.b16 %v730
      %v754 = vunpack.c.l.b16 %v731
      %v755 = vunpack.c.l.b16 %v732
      %v756 = vunpack.c.l.b16 %v733
      %v757 = vunpack.c.l.b16 %v734
      %v758 = vpack.c.b16 %v751, %v750
      %v759 = vpack.c.b16 %v753, %v752
      %v760 = vpack.c.b16 %v755, %v754
      %v761 = vpack.c.b16 %v757, %v756
      %v767 = vsel %vm427, %v735, 0
      %v770 = vsel %vm427, %v736, 0
      %772 = vmatprep.subr.bf16.mxu0 0
      %773 = vmatpush1.bf16.msra.mxu0 %v758
      %774 = vmatprep.subr.bf16.mxu0 0
      %775 = vmatpush1.bf16.msra.mxu0 %v759
      %776 = vmatprep.subr.bf16.mxu0 0
      %777 = vmatpush1.bf16.msra.mxu0 %v760
      %778 = vmatprep.subr.bf16.mxu0 0
      %779 = vmatpush1.bf16.msra.mxu0 %v761
      %780 = vmatprep.subr.bf16.mxu0 0
      %781 = vmatpush1.bf16.msra.mxu0 0
      %782 = vmatprep.subr.bf16.mxu0 0
      %783 = vmatpush1.bf16.msra.mxu0 0
      %784 = vmatprep.subr.bf16.mxu0 0
      %785 = vmatpush1.bf16.msra.mxu0 0
      %786 = vmatprep.subr.bf16.mxu0 0
      %787 = vmatpush1.bf16.msra.mxu0 0
      %788 = vmatprep.subr.bf16.mxu0 0
      %789 = vmatpush1.bf16.msra.mxu0 0
      %790 = vmatprep.subr.bf16.mxu0 0
      %791 = vmatpush1.bf16.msra.mxu0 0
      %792 = vmatprep.subr.bf16.mxu0 0
      %793 = vmatpush1.bf16.msra.mxu0 0
      %794 = vmatprep.subr.bf16.mxu0 0
      %795 = vmatpush1.bf16.msra.mxu0 0
      %796 = vmatprep.subr.bf16.mxu0 0
      %797 = vmatpush1.bf16.msra.mxu0 0
      %798 = vmatprep.subr.bf16.mxu0 0
      %799 = vmatpush1.bf16.msra.mxu0 0
      %800 = vmatprep.subr.bf16.mxu0 0
      %801 = vmatpush1.bf16.msra.mxu0 0
      %802 = vmatprep.subr.bf16.mxu0 0
      %803 = vmatpush1.bf16.msra.mxu0 0
      %804 = vmatprep.mubr.bf16.mxu0 0
      %805 = vmatmul.mubr.bf16.gmra.mrb[0].mxu0 %v767
      %v806 = vpop.f32.mrb[0].mxu0
      %v807 = vadd.f32 %v741, %v806
      %v808 = vpop.f32.mrb[0].mxu0
      %v809 = vpop.f32.mrb[0].mxu0
      %v810 = vadd.f32 %v741, %v809
      %v811 = vpop.f32.mrb[0].mxu0
      %812 = vmatprep.mubr.bf16.mxu0 0
      %813 = vmatmul.mubr.bf16.gmra.mrb[0].mxu0 %v770
      %v814 = vpop.f32.mrb[0].mxu0
      %v815 = vadd.f32 %v741, %v814
      %v816 = vpop.f32.mrb[0].mxu0
      %v817 = vpop.f32.mrb[0].mxu0
      %v818 = vadd.f32 %v741, %v817
      %v819 = vpop.f32.mrb[0].mxu0
      %820 = vdwg.mxu0
      %v821 = vld [vmem:[%s3 + $0xa] sm:$0x1]
      %v822 = vld [vmem:[%s3 + $0xb] sm:$0x1]
      %823 = vadd.xlane.f32.xlu0 %v807
      %v824 = vpop.xlane.xlu0 %823
      %825 = vadd.xlane.f32.xlu0 %v810
      %v826 = vpop.xlane.xlu0 %825
      %827 = vadd.xlane.f32.xlu0 %v815
      %v828 = vpop.xlane.xlu0 %827
      %829 = vadd.xlane.f32.xlu0 %v818
      %v830 = vpop.xlane.xlu0 %829
      %v831 = vmul.f32 %v807, %v807
      %v832 = vmul.f32 %v810, %v810
      %v833 = vmul.f32 %v815, %v815
      %v834 = vmul.f32 %v818, %v818
      %835 = vadd.xlane.f32.xlu0 %v831
      %v836 = vpop.xlane.xlu0 %835
      %837 = vadd.xlane.f32.xlu0 %v832
      %v838 = vpop.xlane.xlu0 %837
      %839 = vadd.xlane.f32.xlu0 %v833
      %v840 = vpop.xlane.xlu0 %839
      %841 = vadd.xlane.f32.xlu0 %v834
      %v842 = vpop.xlane.xlu0 %841
      %v843 = vmul.f32 %v824, 0.03125
      %v844 = vmul.f32 %v826, 0.03125
      %v845 = vmul.f32 %v828, 0.03125
      %v846 = vmul.f32 %v830, 0.03125
      %v847 = vmul.f32 %v836, 0.03125
      %v848 = vmul.f32 %v838, 0.03125
      %v849 = vmul.f32 %v840, 0.03125
      %v850 = vmul.f32 %v842, 0.03125
      %v851 = vmul.f32 %v843, %v843
      %v852 = vmul.f32 %v844, %v844
      %v853 = vmul.f32 %v845, %v845
      %v854 = vmul.f32 %v846, %v846
      %v855 = vsub.f32 %v847, %v851
      %v856 = vsub.f32 %v848, %v852
      %v857 = vsub.f32 %v849, %v853
      %v858 = vsub.f32 %v850, %v854
      %v859 = vsub.f32 %v807, %v843
      %v860 = vsub.f32 %v810, %v844
      %v861 = vsub.f32 %v815, %v845
      %v862 = vsub.f32 %v818, %v846
      %v863 = vadd.f32 %v855, 1e-05
      %v864 = vadd.f32 %v856, 1e-05
      %v865 = vadd.f32 %v857, 1e-05
      %v866 = vadd.f32 %v858, 1e-05
      %v867 = vrsqrt.pop %v863
      %v868 = vrsqrt.pop %v864
      %v869 = vrsqrt.pop %v865
      %v870 = vrsqrt.pop %v866
      %v871 = vmul.f32 %v859, %v867
      %v872 = vmul.f32 %v860, %v868
      %v873 = vmul.f32 %v861, %v869
      %v874 = vmul.f32 %v862, %v870
      %v875 = vlaneseq
      %v876 = vshrl.u32 %v875, 7
      %v877 = vsub.s32 0, %v876
      %v878 = vrot.slane %v821, %v877
      %v879 = vmul.f32 %v871, %v878
      %v880 = vmul.f32 %v872, %v878
      %v881 = vmul.f32 %v873, %v878
      %v882 = vmul.f32 %v874, %v878
      %v883 = vlaneseq
      %v884 = vshrl.u32 %v883, 7
      %v885 = vsub.s32 0, %v884
      %v886 = vrot.slane %v822, %v885
      %v887 = vadd.f32 %v879, %v886
      %v888 = vadd.f32 %v880, %v886
      %v889 = vadd.f32 %v881, %v886
      %v890 = vadd.f32 %v882, %v886
      %v891 = vmax.f32 %v887, 0.0
      %v892 = vmax.f32 %v888, 0.0
      %v893 = vmax.f32 %v889, 0.0
      %v894 = vmax.f32 %v890, 0.0
      %v895 = vadd.f32 %v891, %v301
      %v896 = vadd.f32 %v892, %v302
      %v897 = vadd.f32 %v893, %v303
      %v898 = vadd.f32 %v894, %v304
      %v899 = vmax.f32 %v895, 0.0
      %v900 = vmax.f32 %v896, 0.0
      %v901 = vmax.f32 %v897, 0.0
      %v902 = vmax.f32 %v898, 0.0
      %v903 = vld [vmem:[%s3 + $0xd] sm:$0x1]
      %v904 = vlaneseq
      %v905 = vshrl.u32 %v904, 7
      %v906 = vsub.s32 0, %v905
      %v907 = vrot.slane %v903, %v906
      %v908 = vmul.f32 %v899, %v907
      %v909 = vmul.f32 %v900, %v907
      %v910 = vmul.f32 %v901, %v907
      %v911 = vmul.f32 %v902, %v907
      %912 = vadd.xlane.f32.xlu0 %v908
      %v913 = vpop.xlane.xlu0 %912
      %914 = vadd.xlane.f32.xlu0 %v909
      %v915 = vpop.xlane.xlu0 %914
      %916 = vadd.xlane.f32.xlu0 %v910
      %v917 = vpop.xlane.xlu0 %916
      %918 = vadd.xlane.f32.xlu0 %v911
      %v919 = vpop.xlane.xlu0 %918
      %v920 = vld [vmem:[%s3 + $0xe] sm:$0x1]
      %v921 = vlaneseq
      %v922 = vshrl.u32 %v921, 7
      %v923 = vsub.s32 0, %v922
      %v924 = vrot.slane %v920, %v923
      %v925 = vadd.f32 %v913, %v924
      %v926 = vadd.f32 %v915, %v924
      %v927 = vadd.f32 %v917, %v924
      %v928 = vadd.f32 %v919, %v924
      %vm929 = vcmask 7168
      %930 = vst.msk [vmem:[%s199] sm:$0xff] %vm929, %v925
      %931 = vst.msk [vmem:[%s199 + $0x8] sm:$0xff] %vm929, %v926
      %932 = vst.msk [vmem:[%s199 + $0x10] sm:$0xff] %vm929, %v927
      %933 = vst.msk [vmem:[%s199 + $0x18] sm:$0xff] %vm929, %v928
      %s934 = smul.u32 4, %s15
      %p935 = scmp.lt.s32.totalorder %s934, 7
      %s936 = scalar_select %p935, %s934, 7
      %s937 = smul.addr %s936, 8
      %s938 = scalar_lea.vmem %s4, %s937
      // Predicated region
      $region37: #{critic_forward.1} parent=35 // pred_check
        %p939 = pneg %p122
      $region38: #{critic_forward.1} parent=35 // pred_check_branch
        %941 = sbr.rel (%p939) target = $region40
      $region39: #{critic_forward.1} parent=35 // pred_region
        %s942 = smul.u32 4, %s15
      $region40: #{critic_forward.1} parent=35 // pred_fallthru
        _
    $region36: #{critic_forward.1} parent=5 // pred_fallthru
      _
    %p943 = scmp.le.s32.totalorder 2, %s10
    // Predicated region
    $region41: #{critic_forward.1} parent=5 // pred_check
      %p944 = pneg %p943
    $region42: #{critic_forward.1} parent=5 // pred_check_branch
      %946 = sbr.rel (%p944) target = $region44
    $region43: #{critic_forward.1} parent=5 // pred_region
      %s947 = ssub.s32 %s10, 2
      // Predicated region
      $region45: #{critic_forward.1} parent=43 // pred_check
        %p948 = pneg %p128
      $region46: #{critic_forward.1} parent=43 // pred_check_branch
        %950 = sbr.rel (%p948) target = $region48
      $region47: #{critic_forward.1} parent=43 // pred_region
        %s951 = smul.u32 4, %s16
        %p952 = scmp.lt.s32.totalorder %s951, 7
        %s953 = scalar_select %p952, %s951, 7
        %s954 = smul.addr %s953, 8
        %s955 = scalar_lea.vmem %s4, %s954
      $region48: #{critic_forward.1} parent=43 // pred_fallthru
        _
    $region44: #{critic_forward.1} parent=5 // pred_fallthru
      _
  $region6: #{critic_forward.1} parent=0 // loop_footer
    %s14 = sadd.s32 1, %s10
  $region7: #{critic_forward.1} parent=0 // loop_footer_branch
    %9 = sbr.rel target = $region3
  $region8: #{critic_forward.1} parent=0 // loop_exit
    _

</llo_original>
